<compile_context>
chip_gen: v7x
topology: tpu7x:2x2x1
jax: 0.10.0
libtpu: 0.0.40
codegen_flags: <defaults>
</compile_context>

<pallas_src>
import functools

import jax
import jax.numpy as jnp
from jax.experimental import pallas as pl
from jax.experimental.pallas import tpu as pltpu

_TARGET_BLOCK_BYTES = 4 * 1024 * 1024   # ~4 MiB per block -> ~85%+ of HBM roofline
_VMEM_LIMIT_BYTES = 48 * 1024 * 1024    # 4 x 4 MiB buffers + headroom; fits v7x's 64 MiB


def _round_up(a, b):
    return -(-a // b) * b


def _leaky_relu_kernel(x_ref, o_ref, *, negative_slope):
    x = x_ref[...]
    slope = jnp.asarray(negative_slope, x.dtype)
    o_ref[...] = jnp.where(x >= 0, x, x * slope)


def leaky_relu_pallas(x, negative_slope=0.01, *, donate=False):
    """Elementwise LeakyReLU on an arbitrarily shaped array via a lane-dense Pallas kernel.

    Set donate=True only when the input buffer is donated (e.g. jit donate_argnums);
    it then aliases the output onto the input and halves the HBM footprint.
    """
    orig_shape = x.shape
    dtype = x.dtype
    total = int(x.size)
    if total == 0:
        return x

    itemsize = jnp.dtype(dtype).itemsize
    # Sublane packing: f32 -> 8 rows/vreg, bf16 -> 16, int8/fp8 -> 32.
    sublane = 8 * max(1, 4 // itemsize)

    # ---- Choose a lane-dense (rows, cols) slab; avoid any pad/copy when possible.
    padded_total = total
    if total % 128 == 0:
        cols = 128
        for c in (1024, 2048, 512, 4096, 256, 8192, 128):
            if total % c == 0:
                cols = c
                break
    else:
        cols = 128
        padded_total = _round_up(total, cols)   # minimal pad: < 128 elements

    n_rows = padded_total // cols

    # ---- Block sizing: ~_TARGET_BLOCK_BYTES per block, dtype-aware sublane rounding,
    #      and (when splittable) at least 2 grid steps so both v7x TCs get work.
    if n_rows <= sublane:
        block_rows = n_rows                      # full-extent block: always legal
    else:
        target = max(sublane,
                     (_TARGET_BLOCK_BYTES // (cols * itemsize)) // sublane * sublane)
        half = _round_up(-(-n_rows // 2), sublane)
        block_rows = min(target, half)

    grid_rows = pl.cdiv(n_rows, block_rows)      # Pallas handles a partial last block

    # ---- Build the slab (pure bitcast-reshape in the common, 128-aligned case).
    if padded_total == total:
        slab = x.reshape(n_rows, cols)
    else:
        flat = jnp.pad(x.reshape(-1), (0, padded_total - total))
        slab = flat.reshape(n_rows, cols)

    kernel = functools.partial(_leaky_relu_kernel, negative_slope=negative_slope)

    out = pl.pallas_call(
        kernel,
        out_shape=jax.ShapeDtypeStruct((n_rows, cols), dtype),
        grid=(grid_rows,),
        in_specs=[pl.BlockSpec((block_rows, cols), lambda i: (i, 0))],
        out_specs=pl.BlockSpec((block_rows, cols), lambda i: (i, 0)),
        input_output_aliases=({0: 0} if donate else {}),
        compiler_params=pltpu.CompilerParams(
            dimension_semantics=("parallel",),
            vmem_limit_bytes=_VMEM_LIMIT_BYTES,
        ),
    )(slab)

    if padded_total != total:
        out = out.reshape(-1)[:total]
    return out.reshape(orig_shape)


def leaky_relu_seq_l(info, negative_slope=0.01):
    """Equivalent of LeakyReLUseqL.forward: seqs -> relu_func(seqs); seqL, dim pass through."""
    seqs, seqL, dim = info
    seqs = leaky_relu_pallas(seqs, negative_slope)
    return (seqs, seqL, dim)


if __name__ == "__main__":
    key = jax.random.PRNGKey(0)

    # seqs: (batch=2, channels=4, seq=8, H=16, W=16) -- small shapes consistent
    # with the sequence-wrapper modules this class wraps in OpenGait.
    seqs = jax.random.normal(key, (2, 4, 8, 16, 16), dtype=jnp.float32)
    seqL = jnp.array([8, 8], dtype=jnp.int32)   # sequence lengths, passed through untouched
    dim = 2                                     # sequence dim, passed through untouched

    ref = jnp.where(seqs >= 0, seqs, 0.01 * seqs)   # F.leaky_relu(negative_slope=0.01)

    out_seqs, out_seqL, out_dim = leaky_relu_seq_l((seqs, seqL, dim), negative_slope=0.01)
    out_seqs = jax.block_until_ready(out_seqs)

    assert out_seqs.shape == seqs.shape
    assert out_seqs.dtype == seqs.dtype
    assert jnp.allclose(out_seqs, ref, atol=1e-6, rtol=1e-6)
    assert out_dim == dim
    assert jnp.array_equal(out_seqL, seqL)

    # Extra coverage: bf16 (dtype-aware sublane packing) and a non-128-multiple
    # element count (minimal-pad fallback path).
    x_bf16 = jax.random.normal(jax.random.PRNGKey(1), (2, 4, 16, 16), dtype=jnp.bfloat16)
    y_bf16 = jax.block_until_ready(leaky_relu_pallas(x_bf16, 0.2))
    ref_bf16 = jnp.where(x_bf16 >= 0, x_bf16, jnp.bfloat16(0.2) * x_bf16)
    assert jnp.array_equal(y_bf16, ref_bf16)

    x_odd = jax.random.normal(jax.random.PRNGKey(2), (3, 5, 7), dtype=jnp.float32)
    y_odd = jax.block_until_ready(leaky_relu_pallas(x_odd, 0.01))
    ref_odd = jnp.where(x_odd >= 0, x_odd, 0.01 * x_odd)
    assert jnp.allclose(y_odd, ref_odd, atol=1e-6, rtol=1e-6)

    print("KERNEL_OK")
</pallas_src>

<mosaic_0001>
module attributes {stable_mosaic.version = 11 : i64} {
  func.func @_leaky_relu_kernel(%arg0: i32, %arg1: memref<8x1024xf32, #tpu.memory_space<vmem>>, %arg2: memref<8x1024xf32, #tpu.memory_space<vmem>>) attributes {dimension_semantics = [#tpu.dimension_semantics<parallel>], iteration_bounds = array<i64: 2>, scalar_prefetch = 0 : i64, scratch_operands = 0 : i64, tpu.core_type = #tpu.core_type<tc>, window_params = [{transform_indices = @transform_0, window_bounds = array<i64: 8, 1024>}, {transform_indices = @transform_1, window_bounds = array<i64: 8, 1024>}]} {
    %c0 = arith.constant 0 : index
    %c0_0 = arith.constant 0 : index
    %0 = vector.load %arg1[%c0, %c0_0] : memref<8x1024xf32, #tpu.memory_space<vmem>>, vector<8x1024xf32>
    %cst = arith.constant 0.000000e+00 : f32
    %1 = vector.broadcast %cst : f32 to vector<8x1024xf32>
    %2 = arith.cmpf oge, %0, %1 : vector<8x1024xf32>
    %cst_1 = arith.constant 0.00999999977 : f32
    %3 = vector.broadcast %cst_1 : f32 to vector<8x1024xf32>
    %4 = arith.mulf %0, %3 : vector<8x1024xf32>
    %5 = arith.select %2, %0, %4 : vector<8x1024xi1>, vector<8x1024xf32>
    %c0_2 = arith.constant 0 : index
    %c0_3 = arith.constant 0 : index
    %6 = vector.load %arg2[%c0_2, %c0_3] : memref<8x1024xf32, #tpu.memory_space<vmem>>, vector<8x1024xf32>
    tpu.vector_store %arg2[%c0_2, %c0_3], %5 {strides = array<i32>} : memref<8x1024xf32, #tpu.memory_space<vmem>>, vector<8x1024xf32>,
    return
  }
  func.func @transform_0(%arg0: i32) -> (i32, i32) {
    %c0_i32 = arith.constant 0 : i32
    %c0_i32_0 = arith.constant 0 : i32
    return %arg0, %c0_i32 : i32, i32
  }
  func.func @transform_1(%arg0: i32) -> (i32, i32) {
    %c0_i32 = arith.constant 0 : i32
    %c0_i32_0 = arith.constant 0 : i32
    return %arg0, %c0_i32 : i32, i32
  }
}

</mosaic_0001>

<llo_original>
// kernel: tpu_custom_call.1
$region0: #{tpu_custom_call.1}
  #allocation0 [shape = 'u32[]', space=smem, size = 0x4, offset = 0x4, fixed_abs, tag = 'smem constant byte address 0x4 - core index']
  #allocation1 [shape = 'u32[144,128]{1,0:T(1,128)}', space=vmem, size = 0x12000, scoped, tag = 'internal scratch']
  %s0 = inlined_call_operand.hbm [shape: f32[16,1024], index: 0, kind: input, shape index: {}]
  %s1 = inlined_call_operand.hbm [shape: f32[16,1024], index: 1, kind: output, shape index: {}]
  %s2 = sld [smem:[#allocation0]]
  $region41: #{tpu_custom_call.1} parent=0
    _
  %s4 = ssub.s32 1, %s2
  %s5 = scalar_select 0, %s4, %s2
  $region1: #{tpu_custom_call.1} parent=0
    #allocation2 [shape = 'u8[65536]{0}', space=vmem, size = 0x10000, scoped, tag = 'input window, operand 0']
    #allocation3 [shape = 's32[2]{0}', space=sflag, size = 0x8, scoped, tag = 'scoped memory for tpu_custom_call.1']
    #allocation4 [shape = 's32[2]{0}', space=sflag, size = 0x8, scoped, tag = 'scoped memory for tpu_custom_call.1']
    #allocation5 [shape = 'u8[65536]{0}', space=vmem, size = 0x10000, scoped, tag = 'output window, operand 0']
    %6 = vsyncpa [#allocation3], 0
    %s7 = scalar_lea.sflag [#allocation3], 1
    %8 = vsyncpa %s7, 0
    %9 = vsyncpa [#allocation4], 0
    %s10 = scalar_lea.sflag [#allocation4], 1
    %11 = vsyncpa %s10, 0
    loop: start=0, step=1, limit=4
    $region2: #{tpu_custom_call.1} parent=1 // loop_pre_header
      _
    $region3: #{tpu_custom_call.1} parent=1 // loop_header
      %s13 = sphi 0, %s17
      %p14 = scmp.ge.s32.totalorder %s13, 4
      %s23 = sphi 0, %s25
      %s26 = sphi 0, %s23
      %s27 = sphi 0, %s26
      %s43 = sphi 0, %s27
      %s49 = sphi 0, %s51
      %s52 = sphi 0, %s49
      %s53 = sphi 0, %s52
      %s69 = sphi 0, %s53
    $region4: #{tpu_custom_call.1} parent=1 // loop_header_branch
      %16 = sbr.rel (%p14) target = $region8
    $region5: #{tpu_custom_call.1} parent=1 // loop_body
      %s18 = ssub.s32 %s13, 1
      %s19 = ssub.s32 %s13, 2
      %s20 = sadd.s32 %s13, 1
      %s21 = ssub.s32 %s13, %s20
      %p22 = scmp.eq.s32.totalorder %s21, 0
      %s24 = sadd.s32 %s23, 1
      %s25 = scalar_select %p22, %s23, %s24
      %p28 = pneg %p22
      %p29 = scmp.eq.s32.totalorder %s13, 1
      %p30 = por %p28, %p29
      %p31 = scmp.ne.s32.totalorder %s23, %s26
      %p32 = scmp.eq.s32.totalorder %s13, 0
      %p33 = por %p31, %p32
      %p34 = scmp.ne.s32.totalorder %s23, %s26
      %p35 = scmp.eq.s32.totalorder %s18, 1
      %p36 = por %p34, %p35
      %p37 = scmp.ne.s32.totalorder %s26, %s27
      %p38 = scmp.eq.s32.totalorder %s18, 0
      %p39 = por %p37, %p38
      %p40 = scmp.ne.s32.totalorder %s26, %s27
      %p41 = scmp.eq.s32.totalorder %s19, 1
      %p42 = por %p40, %p41
      %p44 = scmp.ne.s32.totalorder %s27, %s43
      %p45 = scmp.eq.s32.totalorder %s19, 0
      %p46 = por %p44, %p45
      %s47 = ssub.s32 %s13, %s20
      %p48 = scmp.eq.s32.totalorder %s47, 0
      %s50 = sadd.s32 %s49, 1
      %s51 = scalar_select %p48, %s49, %s50
      %p54 = pneg %p48
      %p55 = scmp.eq.s32.totalorder %s13, 1
      %p56 = por %p54, %p55
      %p57 = scmp.ne.s32.totalorder %s49, %s52
      %p58 = scmp.eq.s32.totalorder %s13, 0
      %p59 = por %p57, %p58
      %p60 = scmp.ne.s32.totalorder %s49, %s52
      %p61 = scmp.eq.s32.totalorder %s18, 1
      %p62 = por %p60, %p61
      %p63 = scmp.ne.s32.totalorder %s52, %s53
      %p64 = scmp.eq.s32.totalorder %s18, 0
      %p65 = por %p63, %p64
      %p66 = scmp.ne.s32.totalorder %s52, %s53
      %p67 = scmp.eq.s32.totalorder %s19, 1
      %p68 = por %p66, %p67
      %p70 = scmp.ne.s32.totalorder %s53, %s69
      %p71 = scmp.eq.s32.totalorder %s19, 0
      %p72 = por %p70, %p71
      %p73 = scmp.le.s32.totalorder 1, %s13
      %p74 = scmp.lt.s32.totalorder %s13, 3
      %p75 = pnand %p73, %p74
      %p76 = pneg %p75
      // Predicated region
      $region9: #{tpu_custom_call.1} parent=5 // pred_check
        _
      $region10: #{tpu_custom_call.1} parent=5 // pred_check_branch
        %78 = sbr.rel (%p75) target = $region12
      $region11: #{tpu_custom_call.1} parent=5 // pred_region
        %s79 = ssub.s32 %s13, 1
      $region12: #{tpu_custom_call.1} parent=5 // pred_fallthru
        _
      %p80 = scmp.lt.s32.totalorder %s13, 2
      // Predicated region
      $region13: #{tpu_custom_call.1} parent=5 // pred_check
        %p81 = pneg %p80
      $region14: #{tpu_custom_call.1} parent=5 // pred_check_branch
        %83 = sbr.rel (%p81) target = $region16
      $region15: #{tpu_custom_call.1} parent=5 // pred_region
        // Predicated region
        $region17: #{tpu_custom_call.1} parent=15 // pred_check
          %p84 = pneg %p33
        $region18: #{tpu_custom_call.1} parent=15 // pred_check_branch
          %86 = sbr.rel (%p84) target = $region20
        $region19: #{tpu_custom_call.1} parent=15 // pred_region
          %s87 = sand.u32 %s23, 1
          %s88 = scalar_lea.sflag [#allocation3], %s87
          %s89 = sand.u32 %s23, 1
          %s90 = smul.addr %s89, 64
          %s91 = scalar_lea.vmem [#allocation2], %s90
          %s93 = ssub.s32 1024, 1024
          %94 = vsyncadd %s88, %s93
          %s95 = smul.addr %s13, 8
          %s96 = smul.addr %s95, 128
          %s97 = scalar_lea.hbm %s0, %s96
          %s99 = sshll.u32 %s91, 4
          %s100 = int_to_ptr.vmem [resolvable:$true] %s99
          %102 = dma.hbm_to_vmem [thread:$0]  %s97, 1024, %s100, %s88
        $region20: #{tpu_custom_call.1} parent=15 // pred_fallthru
          _
      $region16: #{tpu_custom_call.1} parent=5 // pred_fallthru
        _
      %p103 = scmp.le.s32.totalorder 1, %s13
      %p104 = scmp.lt.s32.totalorder %s13, 3
      %p105 = pnand %p103, %p104
      %p106 = pneg %p105
      // Predicated region
      $region21: #{tpu_custom_call.1} parent=5 // pred_check
        _
      $region22: #{tpu_custom_call.1} parent=5 // pred_check_branch
        %108 = sbr.rel (%p105) target = $region24
      $region23: #{tpu_custom_call.1} parent=5 // pred_region
        %s109 = ssub.s32 %s13, 1
        %s110 = sand.u32 %s26, 1
        %s111 = scalar_lea.sflag [#allocation3], %s110
        %s112 = sand.u32 %s26, 1
        %s113 = smul.addr %s112, 64
        %s114 = scalar_lea.vmem [#allocation2], %s113
        // Predicated region
        $region25: #{tpu_custom_call.1} parent=23 // pred_check
          %p115 = pneg %p39
        $region26: #{tpu_custom_call.1} parent=23 // pred_check_branch
          %117 = sbr.rel (%p115) target = $region28
        $region27: #{tpu_custom_call.1} parent=23 // pred_region
          %118 = dma.done %s111, 1024
        $region28: #{tpu_custom_call.1} parent=23 // pred_fallthru
          _
        %s119 = sand.u32 %s26, 1
        %s120 = scalar_lea.sflag [#allocation3], %s119
        %s121 = sand.u32 %s26, 1
        %s122 = smul.addr %s121, 64
        %s123 = scalar_lea.vmem [#allocation2], %s122
        %p124 = pneg %p39
        %p125 = pneg %p36
        %p126 = pneg %p65
        %p127 = pneg %p62
        %s128 = sand.u32 %s52, 1
        %s129 = scalar_lea.sflag [#allocation4], %s128
        %s130 = sand.u32 %s52, 1
        %s131 = smul.addr %s130, 64
        %s132 = scalar_lea.vmem [#allocation5], %s131
        %v133 = vld [vmem:[%s114] sm:$0xff]
        %v134 = vld [vmem:[%s114 + $0x8] sm:$0xff]
        %v135 = vld [vmem:[%s114 + $0x10] sm:$0xff]
        %v136 = vld [vmem:[%s114 + $0x18] sm:$0xff]
        %v137 = vld [vmem:[%s114 + $0x20] sm:$0xff]
        %v138 = vld [vmem:[%s114 + $0x28] sm:$0xff]
        %v139 = vld [vmem:[%s114 + $0x30] sm:$0xff]
        %v140 = vld [vmem:[%s114 + $0x38] sm:$0xff]
        %vm141 = vcmp.ge.f32.partialorder %v133, 0.0
        %vm142 = vcmp.ge.f32.partialorder %v134, 0.0
        %vm143 = vcmp.ge.f32.partialorder %v135, 0.0
        %vm144 = vcmp.ge.f32.partialorder %v136, 0.0
        %vm145 = vcmp.ge.f32.partialorder %v137, 0.0
        %vm146 = vcmp.ge.f32.partialorder %v138, 0.0
        %vm147 = vcmp.ge.f32.partialorder %v139, 0.0
        %vm148 = vcmp.ge.f32.partialorder %v140, 0.0
        %v149 = vmul.f32 %v133, 0.01
        %v150 = vmul.f32 %v134, 0.01
        %v151 = vmul.f32 %v135, 0.01
        %v152 = vmul.f32 %v136, 0.01
        %v153 = vmul.f32 %v137, 0.01
        %v154 = vmul.f32 %v138, 0.01
        %v155 = vmul.f32 %v139, 0.01
        %v156 = vmul.f32 %v140, 0.01
        %v157 = vsel %vm141, %v133, %v149
        %v158 = vsel %vm142, %v134, %v150
        %v159 = vsel %vm143, %v135, %v151
        %v160 = vsel %vm144, %v136, %v152
        %v161 = vsel %vm145, %v137, %v153
        %v162 = vsel %vm146, %v138, %v154
        %v163 = vsel %vm147, %v139, %v155
        %v164 = vsel %vm148, %v140, %v156
        %165 = vst [vmem:[%s132] sm:$0xff] %v157
        %166 = vst [vmem:[%s132 + $0x8] sm:$0xff] %v158
        %167 = vst [vmem:[%s132 + $0x10] sm:$0xff] %v159
        %168 = vst [vmem:[%s132 + $0x18] sm:$0xff] %v160
        %169 = vst [vmem:[%s132 + $0x20] sm:$0xff] %v161
        %170 = vst [vmem:[%s132 + $0x28] sm:$0xff] %v162
        %171 = vst [vmem:[%s132 + $0x30] sm:$0xff] %v163
        %172 = vst [vmem:[%s132 + $0x38] sm:$0xff] %v164
        %s173 = sand.u32 %s52, 1
        %s174 = scalar_lea.sflag [#allocation4], %s173
        %s175 = sand.u32 %s52, 1
        %s176 = smul.addr %s175, 64
        %s177 = scalar_lea.vmem [#allocation5], %s176
        // Predicated region
        $region29: #{tpu_custom_call.1} parent=23 // pred_check
          %p178 = pneg %p62
        $region30: #{tpu_custom_call.1} parent=23 // pred_check_branch
          %180 = sbr.rel (%p178) target = $region32
        $region31: #{tpu_custom_call.1} parent=23 // pred_region
          %s182 = ssub.s32 1024, 1024
          %183 = vsyncadd %s174, %s182
          %s184 = smul.addr %s18, 8
          %s185 = smul.addr %s184, 128
          %s186 = scalar_lea.hbm %s1, %s185
          %s188 = sshll.u32 %s177, 4
          %s189 = int_to_ptr.vmem [resolvable:$true] %s188
          %191 = dma.vmem_to_hbm [thread:$0]  %s189, 1024, %s186, %s174
        $region32: #{tpu_custom_call.1} parent=23 // pred_fallthru
          _
      $region24: #{tpu_custom_call.1} parent=5 // pred_fallthru
        _
      %p192 = scmp.le.s32.totalorder 2, %s13
      // Predicated region
      $region33: #{tpu_custom_call.1} parent=5 // pred_check
        %p193 = pneg %p192
      $region34: #{tpu_custom_call.1} parent=5 // pred_check_branch
        %195 = sbr.rel (%p193) target = $region36
      $region35: #{tpu_custom_call.1} parent=5 // pred_region
        %s196 = ssub.s32 %s13, 2
        // Predicated region
        $region37: #{tpu_custom_call.1} parent=35 // pred_check
          %p197 = pneg %p68
        $region38: #{tpu_custom_call.1} parent=35 // pred_check_branch
          %199 = sbr.rel (%p197) target = $region40
        $region39: #{tpu_custom_call.1} parent=35 // pred_region
          %s200 = sand.u32 %s53, 1
          %s201 = scalar_lea.sflag [#allocation4], %s200
          %s202 = sand.u32 %s53, 1
          %s203 = smul.addr %s202, 64
          %s204 = scalar_lea.vmem [#allocation5], %s203
          %205 = dma.done %s201, 1024
        $region40: #{tpu_custom_call.1} parent=35 // pred_fallthru
          _
      $region36: #{tpu_custom_call.1} parent=5 // pred_fallthru
        _
    $region6: #{tpu_custom_call.1} parent=1 // loop_footer
      %s17 = sadd.s32 1, %s13
    $region7: #{tpu_custom_call.1} parent=1 // loop_footer_branch
      %12 = sbr.rel target = $region3
    $region8: #{tpu_custom_call.1} parent=1 // loop_exit
      _
    %206 = vsyncpa [#allocation3], 1
    %s207 = scalar_lea.sflag [#allocation3], 1
    %208 = vsyncpa %s207, 1
    %209 = vsyncpa [#allocation4], 1
    %s210 = scalar_lea.sflag [#allocation4], 1
    %211 = vsyncpa %s210, 1

</llo_original>
